<compile_context>
chip_gen: v7x
topology: tpu7x:2x2x1
jax: 0.10.0
libtpu: 0.0.40
codegen_flags: <defaults>
</compile_context>

<pallas_src>
import functools

import jax
import jax.numpy as jnp
from jax.experimental import pallas as pl
from jax.experimental.pallas import tpu as pltpu


def _encoder_kernel(x_ref, wm_ref, wv_ref, bm_ref, bv_ref, mean_ref, var_ref):
    """One (i, j, k) grid step of the fused mean/variance linear layer.

    The mean/var output blocks have k-invariant index maps, so they stay
    VMEM-resident across the reduction axis and double as f32 accumulators.
    """
    k = pl.program_id(2)

    @pl.when(k == 0)
    def _():
        mean_ref[...] = jnp.zeros_like(mean_ref)
        var_ref[...] = jnp.zeros_like(var_ref)

    x = x_ref[...]                      # (tm, tk) f32
    cdt = wm_ref.dtype                  # bf16 on the fast path (weights pre-cast)

    mean_ref[...] += jnp.dot(x.astype(cdt), wm_ref[...],
                             preferred_element_type=jnp.float32)
    # Square in f32 on the VPU, then cast only for the MXU feed.
    var_ref[...] += jnp.dot((x * x).astype(cdt), wv_ref[...],
                            preferred_element_type=jnp.float32)

    @pl.when(k == pl.num_programs(2) - 1)
    def _():
        # Bias add only once, in the epilogue (biases kept in f32).
        mean_ref[...] += bm_ref[...]
        var_ref[...] += bv_ref[...]


def _round_up(n, m):
    return ((n + m - 1) // m) * m


def _choose_tile(dim, cap, align):
    # cap is a multiple of align, so the padded dim is a multiple of the tile.
    return min(cap, _round_up(dim, align))


@functools.partial(jax.jit, static_argnames=("tm", "tn", "tk", "compute_dtype"))
def encoder_forward(x, w_mu, b_mu, w_rho, b_rho, *,
                    tm=512, tn=512, tk=512, compute_dtype=jnp.bfloat16):
    """Encoder.forward. x: (B, in_dim). Returns (mean, var), each (B, out_dim).

    Weights are stored (in_dim, out_dim) (transposed vs. PyTorch's (out, in)).
    compute_dtype=jnp.bfloat16 (default) hits the bf16-native MXU with f32
    accumulation; pass jnp.float32 for bit-tight numerics (slower MXU path).
    """
    B, d_in = x.shape
    d_out = w_mu.shape[1]

    # Softplus + cast applied ONCE here, not per batch tile inside the grid.
    w_mu_c = w_mu.astype(compute_dtype)
    w_var_c = jax.nn.softplus(w_rho).astype(compute_dtype)
    b_mu_2d = b_mu.reshape(1, d_out).astype(jnp.float32)
    b_var_2d = jax.nn.softplus(b_rho).reshape(1, d_out).astype(jnp.float32)

    batch_align = 16 if compute_dtype == jnp.bfloat16 else 8
    small = (B <= tm) and (d_in <= tk) and (d_out <= tn)

    if small:
        # Full-array blocks, grid (1,1,1): no pad/slice HBM round-trips,
        # weights fetched and resident exactly once.
        tm_, tk_, tn_ = B, d_in, d_out
        Bp, Np = B, d_out
        grid = (1, 1, 1)
        xp, wm, wv, bm, bv = x, w_mu_c, w_var_c, b_mu_2d, b_var_2d
    else:
        tm_ = _choose_tile(B, tm, batch_align)
        tk_ = _choose_tile(d_in, tk, 128)
        tn_ = _choose_tile(d_out, tn, 128)
        Bp = _round_up(B, tm_)
        Kp = _round_up(d_in, tk_)
        Np = _round_up(d_out, tn_)      # >= 128 -> lane-dense output stores
        # Zero padding is exact: padded x columns are 0 and padded W_var rows
        # are 0 (softplus applied before padding); padded batch rows / out
        # columns are sliced away below.
        xp = jnp.pad(x, ((0, Bp - B), (0, Kp - d_in)))
        wm = jnp.pad(w_mu_c, ((0, Kp - d_in), (0, Np - d_out)))
        wv = jnp.pad(w_var_c, ((0, Kp - d_in), (0, Np - d_out)))
        bm = jnp.pad(b_mu_2d, ((0, 0), (0, Np - d_out)))
        bv = jnp.pad(b_var_2d, ((0, 0), (0, Np - d_out)))
        grid = (Bp // tm_, Np // tn_, Kp // tk_)

    w_itemsize = jnp.dtype(compute_dtype).itemsize
    cost = pl.CostEstimate(
        flops=4 * B * d_in * d_out + B * d_in,
        transcendentals=0,  # softplus precomputed in the wrapper
        bytes_accessed=(B * d_in * 4 + 2 * d_in * d_out * w_itemsize
                        + 2 * d_out * 4 + 2 * B * d_out * 4),
    )

    mean_p, var_p = pl.pallas_call(
        _encoder_kernel,
        out_shape=(
            jax.ShapeDtypeStruct((Bp, Np), jnp.float32),
            jax.ShapeDtypeStruct((Bp, Np), jnp.float32),
        ),
        grid_spec=pltpu.PrefetchScalarGridSpec(
            num_scalar_prefetch=0,
            grid=grid,
            in_specs=[
                pl.BlockSpec((tm_, tk_), lambda i, j, k: (i, k)),   # x (f32)
                pl.BlockSpec((tk_, tn_), lambda i, j, k: (k, j)),   # W_mu (bf16)
                pl.BlockSpec((tk_, tn_), lambda i, j, k: (k, j)),   # softplus(W_rho)
                pl.BlockSpec((1, tn_), lambda i, j, k: (0, j)),     # b_mu
                pl.BlockSpec((1, tn_), lambda i, j, k: (0, j)),     # softplus(b_rho)
            ],
            out_specs=[
                pl.BlockSpec((tm_, tn_), lambda i, j, k: (i, j)),   # mean (acc)
                pl.BlockSpec((tm_, tn_), lambda i, j, k: (i, j)),   # var  (acc)
            ],
        ),
        compiler_params=pltpu.CompilerParams(
            dimension_semantics=("parallel", "parallel", "arbitrary"),
        ),
        cost_estimate=cost,
    )(xp, wm, wv, bm, bv)

    if small:
        return mean_p, var_p
    return mean_p[:B, :d_out], var_p[:B, :d_out]


def encoder_reference(x, w_mu, b_mu, w_rho, b_rho):
    """Pure-JAX reference for correctness checking."""
    w_var = jax.nn.softplus(w_rho)
    b_var = jax.nn.softplus(b_rho)
    mean = x @ w_mu + b_mu
    var = (x * x) @ w_var + b_var
    return mean, var


if __name__ == "__main__":
    # Small shapes consistent with the module: in_dim=32, out_dim=16, batch=8.
    B, in_dim, out_dim = 8, 32, 16
    prior_mean, prior_var = 0.0, 1.0   # stored by Prior; pass-through in forward

    key = jax.random.PRNGKey(0)
    k_x, k_wm, k_bm, k_wr, k_br, k_x2 = jax.random.split(key, 6)

    x = jax.random.normal(k_x, (B, in_dim), dtype=jnp.float32)
    w_mu = jax.random.normal(k_wm, (in_dim, out_dim), dtype=jnp.float32) * 0.1
    b_mu = jax.random.normal(k_bm, (out_dim,), dtype=jnp.float32) * 0.1
    w_rho = jax.random.normal(k_wr, (in_dim, out_dim), dtype=jnp.float32) * 0.1 - 3.0
    b_rho = jax.random.normal(k_br, (out_dim,), dtype=jnp.float32) * 0.1 - 3.0

    mean_ref, var_ref = encoder_reference(x, w_mu, b_mu, w_rho, b_rho)

    # 1) Fast path: bf16 MXU compute, full-array blocks (no pad/slice).
    mean, var = encoder_forward(x, w_mu, b_mu, w_rho, b_rho)
    jax.block_until_ready((mean, var))
    assert mean.shape == (B, out_dim) and var.shape == (B, out_dim)
    assert jnp.allclose(mean, mean_ref, atol=5e-2, rtol=5e-2)
    assert jnp.allclose(var, var_ref, atol=5e-2, rtol=5e-2)
    assert bool(jnp.all(var > 0.0))

    # 2) Bit-tight path: f32 compute, tight tolerance.
    mean32, var32 = encoder_forward(x, w_mu, b_mu, w_rho, b_rho,
                                    compute_dtype=jnp.float32)
    jax.block_until_ready((mean32, var32))
    assert jnp.allclose(mean32, mean_ref, atol=1e-5, rtol=1e-5)
    assert jnp.allclose(var32, var_ref, atol=1e-5, rtol=1e-5)

    # 3) Tiled path: dims exceed one tile -> padded (i, j, k) grid with
    #    k-axis accumulation into the output refs.
    B2, in2, out2 = 24, 640, 384
    kk = jax.random.split(k_x2, 5)
    x2 = jax.random.normal(kk[0], (B2, in2), dtype=jnp.float32)
    w_mu2 = jax.random.normal(kk[1], (in2, out2), dtype=jnp.float32) * 0.05
    b_mu2 = jax.random.normal(kk[2], (out2,), dtype=jnp.float32) * 0.1
    w_rho2 = jax.random.normal(kk[3], (in2, out2), dtype=jnp.float32) * 0.1 - 3.0
    b_rho2 = jax.random.normal(kk[4], (out2,), dtype=jnp.float32) * 0.1 - 3.0

    mean2, var2 = encoder_forward(x2, w_mu2, b_mu2, w_rho2, b_rho2)
    jax.block_until_ready((mean2, var2))
    mean2_ref, var2_ref = encoder_reference(x2, w_mu2, b_mu2, w_rho2, b_rho2)
    assert mean2.shape == (B2, out2) and var2.shape == (B2, out2)
    assert jnp.allclose(mean2, mean2_ref, atol=5e-2, rtol=5e-2)
    assert jnp.allclose(var2, var2_ref, atol=5e-2, rtol=5e-2)
    assert bool(jnp.all(var2 > 0.0))

    print("KERNEL_OK")
</pallas_src>

<mosaic_0001>
module attributes {stable_mosaic.version = 11 : i64} {
  func.func @_encoder_kernel(%arg0: i32, %arg1: i32, %arg2: i32, %arg3: memref<8x32xf32, #tpu.memory_space<vmem>>, %arg4: memref<32x16xbf16, #tpu.memory_space<vmem>>, %arg5: memref<32x16xbf16, #tpu.memory_space<vmem>>, %arg6: memref<1x16xf32, #tpu.memory_space<vmem>>, %arg7: memref<1x16xf32, #tpu.memory_space<vmem>>, %arg8: memref<8x16xf32, #tpu.memory_space<vmem>>, %arg9: memref<8x16xf32, #tpu.memory_space<vmem>>) attributes {dimension_semantics = [#tpu.dimension_semantics<parallel>, #tpu.dimension_semantics<parallel>, #tpu.dimension_semantics<arbitrary>], iteration_bounds = array<i64: 1, 1, 1>, scalar_prefetch = 0 : i64, scratch_operands = 0 : i64, tpu.core_type = #tpu.core_type<tc>, window_params = [{transform_indices = @transform_0, window_bounds = array<i64: 8, 32>}, {transform_indices = @transform_1, window_bounds = array<i64: 32, 16>}, {transform_indices = @transform_2, window_bounds = array<i64: 32, 16>}, {transform_indices = @transform_3, window_bounds = array<i64: 1, 16>}, {transform_indices = @transform_4, window_bounds = array<i64: 1, 16>}, {transform_indices = @transform_5, window_bounds = array<i64: 8, 16>}, {transform_indices = @transform_6, window_bounds = array<i64: 8, 16>}]} {
    %c0_i32 = arith.constant 0 : i32
    %0 = arith.cmpi eq, %arg2, %c0_i32 : i32
    %1 = arith.extui %0 : i1 to i32
    %c0_i32_0 = arith.constant 0 : i32
    %2 = arith.cmpi ne, %1, %c0_i32_0 : i32
    scf.if %2 {
      %cst_17 = arith.constant 0.000000e+00 : f32
      %20 = vector.broadcast %cst_17 : f32 to vector<8x16xf32>
      %c0_18 = arith.constant 0 : index
      %c0_19 = arith.constant 0 : index
      %21 = vector.load %arg8[%c0_18, %c0_19] : memref<8x16xf32, #tpu.memory_space<vmem>>, vector<8x16xf32>
      tpu.vector_store %arg8[%c0_18, %c0_19], %20 {strides = array<i32>} : memref<8x16xf32, #tpu.memory_space<vmem>>, vector<8x16xf32>,
      %cst_20 = arith.constant 0.000000e+00 : f32
      %22 = vector.broadcast %cst_20 : f32 to vector<8x16xf32>
      %c0_21 = arith.constant 0 : index
      %c0_22 = arith.constant 0 : index
      %23 = vector.load %arg9[%c0_21, %c0_22] : memref<8x16xf32, #tpu.memory_space<vmem>>, vector<8x16xf32>
      tpu.vector_store %arg9[%c0_21, %c0_22], %22 {strides = array<i32>} : memref<8x16xf32, #tpu.memory_space<vmem>>, vector<8x16xf32>,
    } else {
    }
    %c0 = arith.constant 0 : index
    %c0_1 = arith.constant 0 : index
    %3 = vector.load %arg3[%c0, %c0_1] : memref<8x32xf32, #tpu.memory_space<vmem>>, vector<8x32xf32>
    %c0_2 = arith.constant 0 : index
    %c0_3 = arith.constant 0 : index
    %4 = vector.load %arg8[%c0_2, %c0_3] : memref<8x16xf32, #tpu.memory_space<vmem>>, vector<8x16xf32>
    %5 = arith.truncf %3 : vector<8x32xf32> to vector<8x32xbf16>
    %c0_4 = arith.constant 0 : index
    %c0_5 = arith.constant 0 : index
    %6 = vector.load %arg4[%c0_4, %c0_5] : memref<32x16xbf16, #tpu.memory_space<vmem>>, vector<32x16xbf16>
    %cst = arith.constant dense<0.000000e+00> : vector<8x16xf32>
    %7 = tpu.matmul %5, %6, %cst {dimension_numbers = #tpu.dot_dimension_numbers<[1], [0], [0], [1], [0, 0, 1, 1], [], []>} : vector<8x32xbf16>, vector<32x16xbf16>, vector<8x16xf32> -> vector<8x16xf32>
    %8 = arith.addf %4, %7 : vector<8x16xf32>
    %c0_6 = arith.constant 0 : index
    %c0_7 = arith.constant 0 : index
    %9 = vector.load %arg8[%c0_6, %c0_7] : memref<8x16xf32, #tpu.memory_space<vmem>>, vector<8x16xf32>
    tpu.vector_store %arg8[%c0_6, %c0_7], %8 {strides = array<i32>} : memref<8x16xf32, #tpu.memory_space<vmem>>, vector<8x16xf32>,
    %c0_8 = arith.constant 0 : index
    %c0_9 = arith.constant 0 : index
    %10 = vector.load %arg9[%c0_8, %c0_9] : memref<8x16xf32, #tpu.memory_space<vmem>>, vector<8x16xf32>
    %11 = arith.mulf %3, %3 : vector<8x32xf32>
    %12 = arith.truncf %11 : vector<8x32xf32> to vector<8x32xbf16>
    %c0_10 = arith.constant 0 : index
    %c0_11 = arith.constant 0 : index
    %13 = vector.load %arg5[%c0_10, %c0_11] : memref<32x16xbf16, #tpu.memory_space<vmem>>, vector<32x16xbf16>
    %cst_12 = arith.constant dense<0.000000e+00> : vector<8x16xf32>
    %14 = tpu.matmul %12, %13, %cst_12 {dimension_numbers = #tpu.dot_dimension_numbers<[1], [0], [0], [1], [0, 0, 1, 1], [], []>} : vector<8x32xbf16>, vector<32x16xbf16>, vector<8x16xf32> -> vector<8x16xf32>
    %15 = arith.addf %10, %14 : vector<8x16xf32>
    %c0_13 = arith.constant 0 : index
    %c0_14 = arith.constant 0 : index
    %16 = vector.load %arg9[%c0_13, %c0_14] : memref<8x16xf32, #tpu.memory_space<vmem>>, vector<8x16xf32>
    tpu.vector_store %arg9[%c0_13, %c0_14], %15 {strides = array<i32>} : memref<8x16xf32, #tpu.memory_space<vmem>>, vector<8x16xf32>,
    %c0_i32_15 = arith.constant 0 : i32
    %17 = arith.cmpi eq, %arg2, %c0_i32_15 : i32
    %18 = arith.extui %17 : i1 to i32
    %c0_i32_16 = arith.constant 0 : i32
    %19 = arith.cmpi ne, %18, %c0_i32_16 : i32
    scf.if %19 {
      %c0_17 = arith.constant 0 : index
      %c0_18 = arith.constant 0 : index
      %20 = vector.load %arg8[%c0_17, %c0_18] : memref<8x16xf32, #tpu.memory_space<vmem>>, vector<8x16xf32>
      %c0_19 = arith.constant 0 : index
      %c0_20 = arith.constant 0 : index
      %21 = vector.load %arg6[%c0_19, %c0_20] : memref<1x16xf32, #tpu.memory_space<vmem>>, vector<1x16xf32>
      %22 = vector.broadcast %21 : vector<1x16xf32> to vector<8x16xf32>
      %23 = arith.addf %20, %22 : vector<8x16xf32>
      %c0_21 = arith.constant 0 : index
      %c0_22 = arith.constant 0 : index
      %24 = vector.load %arg8[%c0_21, %c0_22] : memref<8x16xf32, #tpu.memory_space<vmem>>, vector<8x16xf32>
      tpu.vector_store %arg8[%c0_21, %c0_22], %23 {strides = array<i32>} : memref<8x16xf32, #tpu.memory_space<vmem>>, vector<8x16xf32>,
      %c0_23 = arith.constant 0 : index
      %c0_24 = arith.constant 0 : index
      %25 = vector.load %arg9[%c0_23, %c0_24] : memref<8x16xf32, #tpu.memory_space<vmem>>, vector<8x16xf32>
      %c0_25 = arith.constant 0 : index
      %c0_26 = arith.constant 0 : index
      %26 = vector.load %arg7[%c0_25, %c0_26] : memref<1x16xf32, #tpu.memory_space<vmem>>, vector<1x16xf32>
      %27 = vector.broadcast %26 : vector<1x16xf32> to vector<8x16xf32>
      %28 = arith.addf %25, %27 : vector<8x16xf32>
      %c0_27 = arith.constant 0 : index
      %c0_28 = arith.constant 0 : index
      %29 = vector.load %arg9[%c0_27, %c0_28] : memref<8x16xf32, #tpu.memory_space<vmem>>, vector<8x16xf32>
      tpu.vector_store %arg9[%c0_27, %c0_28], %28 {strides = array<i32>} : memref<8x16xf32, #tpu.memory_space<vmem>>, vector<8x16xf32>,
    } else {
    }
    return
  }
  func.func @transform_0(%arg0: i32, %arg1: i32, %arg2: i32) -> (i32, i32) {
    %c0_i32 = arith.constant 0 : i32
    return %arg0, %arg2 : i32, i32
  }
  func.func @transform_1(%arg0: i32, %arg1: i32, %arg2: i32) -> (i32, i32) {
    %c0_i32 = arith.constant 0 : i32
    return %arg2, %arg1 : i32, i32
  }
  func.func @transform_2(%arg0: i32, %arg1: i32, %arg2: i32) -> (i32, i32) {
    %c0_i32 = arith.constant 0 : i32
    return %arg2, %arg1 : i32, i32
  }
  func.func @transform_3(%arg0: i32, %arg1: i32, %arg2: i32) -> (i32, i32) {
    %c0_i32 = arith.constant 0 : i32
    %c0_i32_0 = arith.constant 0 : i32
    return %c0_i32, %arg1 : i32, i32
  }
  func.func @transform_4(%arg0: i32, %arg1: i32, %arg2: i32) -> (i32, i32) {
    %c0_i32 = arith.constant 0 : i32
    %c0_i32_0 = arith.constant 0 : i32
    return %c0_i32, %arg1 : i32, i32
  }
  func.func @transform_5(%arg0: i32, %arg1: i32, %arg2: i32) -> (i32, i32) {
    %c0_i32 = arith.constant 0 : i32
    return %arg0, %arg1 : i32, i32
  }
  func.func @transform_6(%arg0: i32, %arg1: i32, %arg2: i32) -> (i32, i32) {
    %c0_i32 = arith.constant 0 : i32
    return %arg0, %arg1 : i32, i32
  }
}

</mosaic_0001>

<llo_original>
// kernel: encoder_forward.1
$region0: #{encoder_forward.1}
  #allocation0 [shape = 'u32[]', space=smem, size = 0x4, offset = 0x4, fixed_abs, tag = 'smem constant byte address 0x4 - core index']
  #allocation1 [shape = 'u32[144,128]{1,0:T(1,128)}', space=vmem, size = 0x12000, scoped, tag = 'internal scratch']
  %s0 = inlined_call_operand.vmem [shape: f32[8,32], index: 0, kind: input, shape index: {}]
  %s1 = inlined_call_operand.vmem [shape: bf16[32,16], index: 1, kind: input, shape index: {}]
  %s2 = inlined_call_operand.vmem [shape: bf16[32,16], index: 2, kind: input, shape index: {}]
  %s3 = inlined_call_operand.vmem [shape: f32[1,16], index: 3, kind: input, shape index: {}]
  %s4 = inlined_call_operand.vmem [shape: f32[1,16], index: 4, kind: input, shape index: {}]
  %s5 = inlined_call_operand.hbm [shape: f32[8,16], index: 5, kind: output, shape index: {0}]
  %s6 = inlined_call_operand.hbm [shape: f32[8,16], index: 6, kind: output, shape index: {1}]
  %7 = xla_tuple %s5, %s6
  %s8 = sld [smem:[#allocation0]]
  $region46: #{encoder_forward.1} parent=0
    _
  %s10 = ssub.s32 1, %s8
  %s11 = scalar_select 0, %s10, %s8
  $region1: #{encoder_forward.1} parent=0
    #allocation2 [shape = 'u8[4096]{0}', space=vmem, size = 0x1000, scoped, tag = 'output window, operand 0, single buffered']
    #allocation3 [shape = 's32[1]{0}', space=sflag, size = 0x4, scoped, tag = 'scoped memory for encoder_forward.1']
    #allocation4 [shape = 'u8[4096]{0}', space=vmem, size = 0x1000, scoped, tag = 'output window, operand 1, single buffered']
    #allocation5 [shape = 's32[1]{0}', space=sflag, size = 0x4, scoped, tag = 'scoped memory for encoder_forward.1']
    %12 = vsyncpa [#allocation3], 0
    %13 = vsyncpa [#allocation5], 0
    // Predicated region
    $region2: #{encoder_forward.1} parent=1 // pred_check
      _
    $region3: #{encoder_forward.1} parent=1 // pred_check_branch
      %15 = sbr.rel (0) target = $region5
    $region4: #{encoder_forward.1} parent=1 // pred_region
      _
    $region5: #{encoder_forward.1} parent=1 // pred_fallthru
      _
    // Predicated region
    $region6: #{encoder_forward.1} parent=1 // pred_check
      _
    $region7: #{encoder_forward.1} parent=1 // pred_check_branch
      %17 = sbr.rel (0) target = $region9
    $region8: #{encoder_forward.1} parent=1 // pred_region
      _
    $region9: #{encoder_forward.1} parent=1 // pred_fallthru
      _
    // Predicated region
    $region10: #{encoder_forward.1} parent=1 // pred_check
      _
    $region11: #{encoder_forward.1} parent=1 // pred_check_branch
      %19 = sbr.rel (0) target = $region13
    $region12: #{encoder_forward.1} parent=1 // pred_region
      _
    $region13: #{encoder_forward.1} parent=1 // pred_fallthru
      _
    // Predicated region
    $region14: #{encoder_forward.1} parent=1 // pred_check
      _
    $region15: #{encoder_forward.1} parent=1 // pred_check_branch
      %21 = sbr.rel (0) target = $region17
    $region16: #{encoder_forward.1} parent=1 // pred_region
      _
    $region17: #{encoder_forward.1} parent=1 // pred_fallthru
      _
    // Predicated region
    $region18: #{encoder_forward.1} parent=1 // pred_check
      _
    $region19: #{encoder_forward.1} parent=1 // pred_check_branch
      %23 = sbr.rel (0) target = $region21
    $region20: #{encoder_forward.1} parent=1 // pred_region
      _
    $region21: #{encoder_forward.1} parent=1 // pred_fallthru
      _
    %p25 = scmp.eq.s32.totalorder 0, 0
    // Predicated region
    $region22: #{encoder_forward.1} parent=1 // pred_check
      %p26 = pneg %p25
    $region23: #{encoder_forward.1} parent=1 // pred_check_branch
      %28 = sbr.rel (%p26) target = $region25
    $region24: #{encoder_forward.1} parent=1 // pred_region
      %vm29 = vcmask 130048
      %30 = vst.msk [vmem:[#allocation2] sm:$0xff] %vm29, 0.0
      %31 = vst.msk [vmem:[#allocation4] sm:$0xff] %vm29, 0.0
    $region25: #{encoder_forward.1} parent=1 // pred_fallthru
      _
    %v32 = vld [vmem:[%s0] sm:$0xff]
    %v33 = vld [vmem:[#allocation2] sm:$0xff]
    %v34 = vpack.c.bf16 %v32, %v32
    %v35 = vld [vmem:[%s1] sm:$0xf]
    %v36 = vld [vmem:[%s1 + $0x4] sm:$0xf]
    %v37 = vld [vmem:[%s1 + $0x8] sm:$0xf]
    %v38 = vld [vmem:[%s1 + $0xc] sm:$0xf]
    %v43 = vunpack.c.l.b16 %v35
    %v44 = vunpack.c.l.b16 %v36
    %v45 = vunpack.c.l.b16 %v37
    %v46 = vunpack.c.l.b16 %v38
    %v47 = vpack.c.b16 %v44, %v43
    %v48 = vpack.c.b16 %v46, %v45
    %vm51 = vcmask 261120
    %v53 = vsel %vm51, %v34, 0
    %55 = vmatprep.subr.bf16.mxu0 0
    %56 = vmatpush1.bf16.msra.mxu0 %v47
    %57 = vmatprep.subr.bf16.mxu0 0
    %58 = vmatpush1.bf16.msra.mxu0 %v48
    %59 = vmatprep.subr.bf16.mxu0 0
    %60 = vmatpush1.bf16.msra.mxu0 0
    %61 = vmatprep.subr.bf16.mxu0 0
    %62 = vmatpush1.bf16.msra.mxu0 0
    %63 = vmatprep.subr.bf16.mxu0 0
    %64 = vmatpush1.bf16.msra.mxu0 0
    %65 = vmatprep.subr.bf16.mxu0 0
    %66 = vmatpush1.bf16.msra.mxu0 0
    %67 = vmatprep.subr.bf16.mxu0 0
    %68 = vmatpush1.bf16.msra.mxu0 0
    %69 = vmatprep.subr.bf16.mxu0 0
    %70 = vmatpush1.bf16.msra.mxu0 0
    %71 = vmatprep.subr.bf16.mxu0 0
    %72 = vmatpush1.bf16.msra.mxu0 0
    %73 = vmatprep.subr.bf16.mxu0 0
    %74 = vmatpush1.bf16.msra.mxu0 0
    %75 = vmatprep.subr.bf16.mxu0 0
    %76 = vmatpush1.bf16.msra.mxu0 0
    %77 = vmatprep.subr.bf16.mxu0 0
    %78 = vmatpush1.bf16.msra.mxu0 0
    %79 = vmatprep.subr.bf16.mxu0 0
    %80 = vmatpush1.bf16.msra.mxu0 0
    %81 = vmatprep.subr.bf16.mxu0 0
    %82 = vmatpush1.bf16.msra.mxu0 0
    %83 = vmatprep.subr.bf16.mxu0 0
    %84 = vmatpush1.bf16.msra.mxu0 0
    %85 = vmatprep.subr.bf16.mxu0 0
    %86 = vmatpush1.bf16.msra.mxu0 0
    %87 = vmatprep.mubr.bf16.mxu0 0
    %88 = vmatmul.mubr.bf16.gmra.mrb[0].mxu0 %v53
    %v89 = vpop.f32.mrb[0].mxu0
    %v90 = vadd.f32 0.0, %v89
    %v91 = vpop.f32.mrb[0].mxu0
    %v92 = vpop.f32.mrb[0].mxu0
    %v93 = vpop.f32.mrb[0].mxu0
    %94 = vdwg.mxu0
    %v95 = vadd.f32 %v33, %v90
    %vm96 = vcmask 130048
    %97 = vst.msk [vmem:[#allocation2] sm:$0xff] %vm96, %v95
    %v98 = vld [vmem:[#allocation4] sm:$0xff]
    %v99 = vmul.f32 %v32, %v32
    %v100 = vpack.c.bf16 %v99, %v99
    %v101 = vld [vmem:[%s2] sm:$0xf]
    %v102 = vld [vmem:[%s2 + $0x4] sm:$0xf]
    %v103 = vld [vmem:[%s2 + $0x8] sm:$0xf]
    %v104 = vld [vmem:[%s2 + $0xc] sm:$0xf]
    %v109 = vunpack.c.l.b16 %v101
    %v110 = vunpack.c.l.b16 %v102
    %v111 = vunpack.c.l.b16 %v103
    %v112 = vunpack.c.l.b16 %v104
    %v113 = vpack.c.b16 %v110, %v109
    %v114 = vpack.c.b16 %v112, %v111
    %v118 = vsel %vm51, %v100, 0
    %120 = vmatprep.subr.bf16.mxu0 0
    %121 = vmatpush1.bf16.msra.mxu0 %v113
    %122 = vmatprep.subr.bf16.mxu0 0
    %123 = vmatpush1.bf16.msra.mxu0 %v114
    %124 = vmatprep.subr.bf16.mxu0 0
    %125 = vmatpush1.bf16.msra.mxu0 0
    %126 = vmatprep.subr.bf16.mxu0 0
    %127 = vmatpush1.bf16.msra.mxu0 0
    %128 = vmatprep.subr.bf16.mxu0 0
    %129 = vmatpush1.bf16.msra.mxu0 0
    %130 = vmatprep.subr.bf16.mxu0 0
    %131 = vmatpush1.bf16.msra.mxu0 0
    %132 = vmatprep.subr.bf16.mxu0 0
    %133 = vmatpush1.bf16.msra.mxu0 0
    %134 = vmatprep.subr.bf16.mxu0 0
    %135 = vmatpush1.bf16.msra.mxu0 0
    %136 = vmatprep.subr.bf16.mxu0 0
    %137 = vmatpush1.bf16.msra.mxu0 0
    %138 = vmatprep.subr.bf16.mxu0 0
    %139 = vmatpush1.bf16.msra.mxu0 0
    %140 = vmatprep.subr.bf16.mxu0 0
    %141 = vmatpush1.bf16.msra.mxu0 0
    %142 = vmatprep.subr.bf16.mxu0 0
    %143 = vmatpush1.bf16.msra.mxu0 0
    %144 = vmatprep.subr.bf16.mxu0 0
    %145 = vmatpush1.bf16.msra.mxu0 0
    %146 = vmatprep.subr.bf16.mxu0 0
    %147 = vmatpush1.bf16.msra.mxu0 0
    %148 = vmatprep.subr.bf16.mxu0 0
    %149 = vmatpush1.bf16.msra.mxu0 0
    %150 = vmatprep.subr.bf16.mxu0 0
    %151 = vmatpush1.bf16.msra.mxu0 0
    %152 = vmatprep.mubr.bf16.mxu0 0
    %153 = vmatmul.mubr.bf16.gmra.mrb[0].mxu0 %v118
    %v154 = vpop.f32.mrb[0].mxu0
    %v155 = vadd.f32 0.0, %v154
    %v156 = vpop.f32.mrb[0].mxu0
    %v157 = vpop.f32.mrb[0].mxu0
    %v158 = vpop.f32.mrb[0].mxu0
    %159 = vdwg.mxu0
    %v160 = vadd.f32 %v98, %v155
    %161 = vst.msk [vmem:[#allocation4] sm:$0xff] %vm96, %v160
    // Predicated region
    $region26: #{encoder_forward.1} parent=1 // pred_check
      %p162 = pneg %p25
    $region27: #{encoder_forward.1} parent=1 // pred_check_branch
      %164 = sbr.rel (%p162) target = $region29
    $region28: #{encoder_forward.1} parent=1 // pred_region
      %v165 = vld [vmem:[#allocation2] sm:$0xff]
      %v166 = vld [vmem:[%s3] sm:$0x1]
      %v168 = vlaneseq
      %v169 = vshrl.u32 %v168, 7
      %v170 = vsub.s32 0, %v169
      %v171 = vrot.slane %v166, %v170
      %v173 = vadd.f32 %v165, %v171
      %174 = vst.msk [vmem:[#allocation2] sm:$0xff] %vm96, %v173
      %v175 = vld [vmem:[#allocation4] sm:$0xff]
      %v176 = vld [vmem:[%s4] sm:$0x1]
      %v178 = vlaneseq
      %v179 = vshrl.u32 %v178, 7
      %v180 = vsub.s32 0, %v179
      %v181 = vrot.slane %v176, %v180
      %v183 = vadd.f32 %v175, %v181
      %184 = vst.msk [vmem:[#allocation4] sm:$0xff] %vm96, %v183
    $region29: #{encoder_forward.1} parent=1 // pred_fallthru
      _
    // Predicated region
    $region30: #{encoder_forward.1} parent=1 // pred_check
      _
    $region31: #{encoder_forward.1} parent=1 // pred_check_branch
      %186 = sbr.rel (0) target = $region33
    $region32: #{encoder_forward.1} parent=1 // pred_region
      %s188 = ssub.s32 128, 128
      %189 = vsyncadd [#allocation3], %s188
      %s191 = sshll.u32 [#allocation2], 4
      %s192 = int_to_ptr.vmem [resolvable:$true] %s191
      %194 = dma.vmem_to_hbm [thread:$0]  %s192, 128, %s5, [#allocation3]
    $region33: #{encoder_forward.1} parent=1 // pred_fallthru
      _
    // Predicated region
    $region34: #{encoder_forward.1} parent=1 // pred_check
      _
    $region35: #{encoder_forward.1} parent=1 // pred_check_branch
      %196 = sbr.rel (0) target = $region37
    $region36: #{encoder_forward.1} parent=1 // pred_region
      %s198 = ssub.s32 128, 128
      %199 = vsyncadd [#allocation5], %s198
      %s201 = sshll.u32 [#allocation4], 4
      %s202 = int_to_ptr.vmem [resolvable:$true] %s201
      %204 = dma.vmem_to_hbm [thread:$0]  %s202, 128, %s6, [#allocation5]
    $region37: #{encoder_forward.1} parent=1 // pred_fallthru
      _
    // Predicated region
    $region38: #{encoder_forward.1} parent=1 // pred_check
      _
    $region39: #{encoder_forward.1} parent=1 // pred_check_branch
      %206 = sbr.rel (0) target = $region41
    $region40: #{encoder_forward.1} parent=1 // pred_region
      %207 = dma.done [#allocation3], 128
    $region41: #{encoder_forward.1} parent=1 // pred_fallthru
      _
    // Predicated region
    $region42: #{encoder_forward.1} parent=1 // pred_check
      _
    $region43: #{encoder_forward.1} parent=1 // pred_check_branch
      %209 = sbr.rel (0) target = $region45
    $region44: #{encoder_forward.1} parent=1 // pred_region
      %210 = dma.done [#allocation5], 128
    $region45: #{encoder_forward.1} parent=1 // pred_fallthru
      _
    %211 = vsyncpa [#allocation3], 1
    %212 = vsyncpa [#allocation5], 1

</llo_original>
